<compile_context>
chip_gen: v7x
topology: tpu7x:2x2x1
jax: 0.10.0
libtpu: 0.0.40
codegen_flags: <defaults>
</compile_context>

<pallas_src>
import functools

import jax
import jax.numpy as jnp
from jax.experimental import pallas as pl
from jax.experimental.pallas import tpu as pltpu


def _cross_bce_kernel(x_ref, w_ref, y_ref, b_ref, out_ref, acc_ref, *,
                      batch, block_rows, tiles_per_split, apply_mask):
    c = pl.program_id(0)          # parallel batch split (one per TC on v7x)
    i = pl.program_id(1)          # sequential tile within the split

    @pl.when(i == 0)
    def _init():
        acc_ref[...] = jnp.zeros_like(acc_ref)

    x = x_ref[...]                               # [TB, H], input dtype
    w = w_ref[...]                               # [1, H], same dtype as x
    y = y_ref[...].astype(jnp.float32)           # [TB, 1]
    b = b_ref[0, 0]                              # scalar bias (SMEM, f32)

    # Linear head: VPU multiply in the input dtype (bf16-native on v6e/v7x),
    # f32 accumulation for the XLU lane reduction.  Avoids a degenerate N=1
    # MXU matmul that would waste almost the whole systolic array.
    prod = (x * w).astype(jnp.float32)
    z = jnp.sum(prod, axis=-1, keepdims=True) + b        # [TB, 1] f32 logits

    # BCE via log-sigmoid identities (stable softplus, one exp + one log1p):
    #   log p     = log sigmoid(z)  = -softplus(-z)
    #   log (1-p) = log sigmoid(-z) = -z - softplus(-z)
    # PyTorch BCELoss clamps each log term at -100.
    sp = jnp.maximum(-z, 0.0) + jnp.log1p(jnp.exp(-jnp.abs(z)))
    log_p = jnp.maximum(-sp, -100.0)
    log_1mp = jnp.maximum(-z - sp, -100.0)
    per_elem = -(y * log_p + (1.0 - y) * log_1mp)        # [TB, 1]

    if apply_mask:
        # Mask padded rows of a ragged tail tile and fully-duplicated clamped
        # tiles.  Select (not multiply) so garbage rows can't leak NaN/Inf.
        t = c * tiles_per_split + i
        row = t * block_rows + jax.lax.broadcasted_iota(
            jnp.int32, per_elem.shape, 0)
        per_elem = jnp.where(row < batch, per_elem, 0.0)

    # Per-row partial sums in a VMEM accumulator (VPU adds only).
    acc_ref[...] += per_elem

    @pl.when(i == pl.num_programs(1) - 1)
    def _finalize():
        total = jnp.sum(acc_ref[...])                    # one XLU reduce
        out_ref[...] = jnp.zeros(out_ref.shape, jnp.float32) + total


def cross_bce_loss(x, w, b, y, *, block_rows=None, num_splits=2):
    """mean(BCE(sigmoid(x @ w + b), y)).

    x: [B, H] (f32 or bf16), w: [H] or [H, 1], b: scalar / [1], y: [B] in [0,1].
    """
    batch, hidden = x.shape
    itemsize = x.dtype.itemsize
    w2d = jnp.asarray(w).reshape(1, hidden).astype(x.dtype)
    b2d = jnp.asarray(b, dtype=jnp.float32).reshape(1, 1)
    y2d = jnp.asarray(y).reshape(batch, 1)

    # Batch tile: sized by bytes (~12 MiB per pipeline buffer so the double
    # buffer + temporaries fit all generations, incl. v7x's 64 MiB/core),
    # rounded to a multiple of 8 sublanes; soft cap of 4096 rows keeps the
    # lane-padded [TB,1] column temporaries bounded.
    if block_rows is None:
        per_buffer_budget = 12 * 1024 * 1024
        block_rows = per_buffer_budget // (hidden * itemsize)
        block_rows = min(block_rows, 4096)
    block_rows = int(block_rows)
    if block_rows >= batch:
        block_rows = batch                   # single full-extent block
    else:
        block_rows = max(8, (block_rows // 8) * 8)

    num_tiles = pl.cdiv(batch, block_rows)
    num_splits = max(1, min(int(num_splits), num_tiles))
    tiles_per_split = pl.cdiv(num_tiles, num_splits)
    apply_mask = (num_splits * tiles_per_split * block_rows) != batch

    def tile_index(c, i):
        # Flat tile id; clamped so a padded trailing tile re-reads the last
        # real tile (its rows are fully masked inside the kernel).
        return jnp.minimum(c * tiles_per_split + i, num_tiles - 1)

    # Explicit scoped-VMEM limit matching the chosen tiles (v5e default is
    # only 16 MiB); capped well under v7x's 64 MiB physical VMEM per core.
    x_tile_bytes = block_rows * hidden * itemsize
    col_bytes = ((block_rows + 7) // 8) * 8 * 128 * 4   # lane-padded column
    vmem_limit = int(2 * x_tile_bytes + 3 * col_bytes + 16 * 1024 * 1024)
    vmem_limit = max(16 * 1024 * 1024, min(vmem_limit, 56 * 1024 * 1024))

    kernel = functools.partial(
        _cross_bce_kernel, batch=batch, block_rows=block_rows,
        tiles_per_split=tiles_per_split, apply_mask=apply_mask)

    partials = pl.pallas_call(
        kernel,
        out_shape=jax.ShapeDtypeStruct((num_splits, 8, 128), jnp.float32),
        grid_spec=pltpu.PrefetchScalarGridSpec(
            num_scalar_prefetch=0,
            grid=(num_splits, tiles_per_split),
            in_specs=[
                pl.BlockSpec((block_rows, hidden),
                             lambda c, i: (tile_index(c, i), 0)),          # x
                pl.BlockSpec((1, hidden), lambda c, i: (0, 0)),            # w
                pl.BlockSpec((block_rows, 1),
                             lambda c, i: (tile_index(c, i), 0)),          # y
                pl.BlockSpec(memory_space=pltpu.MemorySpace.SMEM),         # b
            ],
            out_specs=pl.BlockSpec((1, 8, 128), lambda c, i: (c, 0, 0)),
            scratch_shapes=[pltpu.VMEM((block_rows, 1), jnp.float32)],
        ),
        compiler_params=pltpu.CompilerParams(
            dimension_semantics=("parallel", "arbitrary"),
            vmem_limit_bytes=vmem_limit),
    )(x, w2d, y2d, b2d)

    # Combine the per-split partial sums; exact mean over the true batch.
    return jnp.sum(partials[:, 0, 0]) * (1.0 / batch)


if __name__ == "__main__":
    key = jax.random.PRNGKey(0)
    k_x, k_w, k_b, k_y = jax.random.split(key, 4)

    def reference(x, w, b, y):
        # sigmoid -> flatten -> BCELoss (mean, PyTorch's -100 log clamp).
        xf = x.astype(jnp.float32)
        wf = jnp.asarray(w, jnp.float32).reshape(-1, 1)
        bf = jnp.asarray(b, jnp.float32).reshape(1, 1)
        p = jax.nn.sigmoid(xf @ wf + bf).reshape(-1)
        return jnp.mean(
            -(y * jnp.maximum(jnp.log(p), -100.0)
              + (1.0 - y) * jnp.maximum(jnp.log(1.0 - p), -100.0)))

    # Config 1: ragged tail + 2-way split, multi-step accumulation.
    batch, hidden = 13, 32
    x = jax.random.normal(k_x, (batch, hidden), dtype=jnp.float32)
    w = jax.random.normal(k_w, (hidden,), dtype=jnp.float32) * 0.05
    b = jax.random.normal(k_b, (1,), dtype=jnp.float32) * 0.05
    y = (jax.random.uniform(k_y, (batch,)) > 0.5).astype(jnp.float32)
    loss = cross_bce_loss(x, w, b, y, block_rows=8, num_splits=2)
    jax.block_until_ready(loss)
    ref = reference(x, w, b, y)
    assert jnp.allclose(loss, ref, atol=1e-5, rtol=1e-5), (loss, ref)

    # Config 2: odd tile count -> one fully-masked duplicated tile on split 1.
    batch2, hidden2 = 200, 128
    x2 = jax.random.normal(k_x, (batch2, hidden2), dtype=jnp.float32)
    w2 = jax.random.normal(k_w, (hidden2,), dtype=jnp.float32) * 0.05
    b2 = jax.random.normal(k_b, (1,), dtype=jnp.float32) * 0.05
    y2 = (jax.random.uniform(k_y, (batch2,)) > 0.5).astype(jnp.float32)
    loss2 = cross_bce_loss(x2, w2, b2, y2, block_rows=48, num_splits=2)
    jax.block_until_ready(loss2)
    ref2 = reference(x2, w2, b2, y2)
    assert jnp.allclose(loss2, ref2, atol=1e-5, rtol=1e-5), (loss2, ref2)

    # Config 3: bf16 inputs, automatic tile sizing (single full-extent block).
    x3 = x2.astype(jnp.bfloat16)
    w3 = w2.astype(jnp.bfloat16)
    loss3 = cross_bce_loss(x3, w3, b2, y2)
    jax.block_until_ready(loss3)
    ref3 = reference(x3, w3.astype(jnp.float32), b2, y2)
    assert jnp.allclose(loss3, ref3, atol=1e-2, rtol=1e-2), (loss3, ref3)

    print("KERNEL_OK")
</pallas_src>

<mosaic_0001>
module attributes {stable_mosaic.version = 11 : i64} {
  func.func @_cross_bce_kernel(%arg0: i32, %arg1: i32, %arg2: memref<8x32xf32, #tpu.memory_space<vmem>>, %arg3: memref<1x32xf32, #tpu.memory_space<vmem>>, %arg4: memref<8x1xf32, #tpu.memory_space<vmem>>, %arg5: memref<1x1xf32, #tpu.memory_space<smem>>, %arg6: memref<1x8x128xf32, #tpu.memory_space<vmem>>, %arg7: memref<8x1xf32, #tpu.memory_space<vmem>>) attributes {dimension_semantics = [#tpu.dimension_semantics<parallel>, #tpu.dimension_semantics<arbitrary>], iteration_bounds = array<i64: 2, 1>, scalar_prefetch = 0 : i64, scratch_operands = 1 : i64, tpu.core_type = #tpu.core_type<tc>, window_params = [{transform_indices = @transform_0, window_bounds = array<i64: 8, 32>}, {pipeline_mode = #tpu.pipeline_mode<synchronous>, transform_indices = @transform_1, window_bounds = array<i64: 1, 32>}, {transform_indices = @transform_2, window_bounds = array<i64: 8, 1>}, {transform_indices = @transform_3, window_bounds = array<i64: 1, 1>}, {transform_indices = @transform_4, window_bounds = array<i64: 1, 8, 128>}]} {
    %c0_i32 = arith.constant 0 : i32
    %0 = arith.cmpi eq, %arg1, %c0_i32 : i32
    %1 = arith.extui %0 : i1 to i32
    %c0_i32_0 = arith.constant 0 : i32
    %2 = arith.cmpi ne, %1, %c0_i32_0 : i32
    scf.if %2 {
      %cst_24 = arith.constant 0.000000e+00 : f32
      %55 = vector.broadcast %cst_24 : f32 to vector<8x1xf32>
      %c0_25 = arith.constant 0 : index
      %c0_26 = arith.constant 0 : index
      %56 = vector.load %arg7[%c0_25, %c0_26] : memref<8x1xf32, #tpu.memory_space<vmem>>, vector<8x1xf32>
      tpu.vector_store %arg7[%c0_25, %c0_26], %55 {strides = array<i32>} : memref<8x1xf32, #tpu.memory_space<vmem>>, vector<8x1xf32>,
    } else {
    }
    %c0 = arith.constant 0 : index
    %c0_1 = arith.constant 0 : index
    %3 = vector.load %arg2[%c0, %c0_1] : memref<8x32xf32, #tpu.memory_space<vmem>>, vector<8x32xf32>
    %c0_2 = arith.constant 0 : index
    %c0_3 = arith.constant 0 : index
    %4 = vector.load %arg3[%c0_2, %c0_3] : memref<1x32xf32, #tpu.memory_space<vmem>>, vector<1x32xf32>
    %c0_4 = arith.constant 0 : index
    %c0_5 = arith.constant 0 : index
    %5 = vector.load %arg4[%c0_4, %c0_5] : memref<8x1xf32, #tpu.memory_space<vmem>>, vector<8x1xf32>
    %c0_6 = arith.constant 0 : index
    %c0_7 = arith.constant 0 : index
    %6 = memref.load %arg5[%c0_6, %c0_7] : memref<1x1xf32, #tpu.memory_space<smem>>
    %7 = vector.broadcast %4 : vector<1x32xf32> to vector<8x32xf32>
    %8 = arith.mulf %3, %7 : vector<8x32xf32>
    %cst = arith.constant dense<0.000000e+00> : vector<8xf32>
    %9 = vector.multi_reduction <add>, %8, %cst [1] : vector<8x32xf32> to vector<8xf32>
    %10 = vector.shape_cast %9 : vector<8xf32> to vector<8x1xf32>
    %11 = vector.broadcast %6 : f32 to vector<8x1xf32>
    %12 = arith.addf %10, %11 : vector<8x1xf32>
    %cst_8 = arith.constant 0.000000e+00 : f32
    %13 = vector.broadcast %cst_8 : f32 to vector<8x1xf32>
    %14 = arith.subf %13, %12 : vector<8x1xf32>
    %cst_9 = arith.constant 0.000000e+00 : f32
    %15 = vector.broadcast %cst_9 : f32 to vector<8x1xf32>
    %16 = arith.maximumf %14, %15 : vector<8x1xf32>
    %17 = math.absf %12 : vector<8x1xf32>
    %cst_10 = arith.constant 0.000000e+00 : f32
    %18 = vector.broadcast %cst_10 : f32 to vector<8x1xf32>
    %19 = arith.subf %18, %17 : vector<8x1xf32>
    %20 = math.exp %19 : vector<8x1xf32>
    %21 = math.log1p %20 : vector<8x1xf32>
    %22 = arith.addf %16, %21 : vector<8x1xf32>
    %cst_11 = arith.constant 0.000000e+00 : f32
    %23 = vector.broadcast %cst_11 : f32 to vector<8x1xf32>
    %24 = arith.subf %23, %22 : vector<8x1xf32>
    %cst_12 = arith.constant -1.000000e+02 : f32
    %25 = vector.broadcast %cst_12 : f32 to vector<8x1xf32>
    %26 = arith.maximumf %24, %25 : vector<8x1xf32>
    %cst_13 = arith.constant 0.000000e+00 : f32
    %27 = vector.broadcast %cst_13 : f32 to vector<8x1xf32>
    %28 = arith.subf %27, %12 : vector<8x1xf32>
    %29 = arith.subf %28, %22 : vector<8x1xf32>
    %cst_14 = arith.constant -1.000000e+02 : f32
    %30 = vector.broadcast %cst_14 : f32 to vector<8x1xf32>
    %31 = arith.maximumf %29, %30 : vector<8x1xf32>
    %32 = arith.mulf %5, %26 : vector<8x1xf32>
    %cst_15 = arith.constant 1.000000e+00 : f32
    %33 = vector.broadcast %cst_15 : f32 to vector<8x1xf32>
    %34 = arith.subf %33, %5 : vector<8x1xf32>
    %35 = arith.mulf %34, %31 : vector<8x1xf32>
    %36 = arith.addf %32, %35 : vector<8x1xf32>
    %cst_16 = arith.constant 0.000000e+00 : f32
    %37 = vector.broadcast %cst_16 : f32 to vector<8x1xf32>
    %38 = arith.subf %37, %36 : vector<8x1xf32>
    %c1_i32 = arith.constant 1 : i32
    %39 = arith.muli %arg0, %c1_i32 : i32
    %40 = arith.addi %39, %arg1 : i32
    %c8_i32 = arith.constant 8 : i32
    %41 = arith.muli %40, %c8_i32 : i32
    %42 = tpu.iota {dimensions = array<i32: 0>} : vector<8x1xi32>
    %43 = vector.broadcast %41 : i32 to vector<8x1xi32>
    %44 = arith.addi %43, %42 : vector<8x1xi32>
    %c13_i32 = arith.constant 13 : i32
    %45 = vector.broadcast %c13_i32 : i32 to vector<8x1xi32>
    %46 = arith.cmpi slt, %44, %45 : vector<8x1xi32>
    %cst_17 = arith.constant 0.000000e+00 : f32
    %47 = vector.broadcast %cst_17 : f32 to vector<8x1xf32>
    %48 = arith.select %46, %38, %47 : vector<8x1xi1>, vector<8x1xf32>
    %c0_18 = arith.constant 0 : index
    %c0_19 = arith.constant 0 : index
    %49 = vector.load %arg7[%c0_18, %c0_19] : memref<8x1xf32, #tpu.memory_space<vmem>>, vector<8x1xf32>
    %50 = arith.addf %49, %48 : vector<8x1xf32>
    %c0_20 = arith.constant 0 : index
    %c0_21 = arith.constant 0 : index
    %51 = vector.load %arg7[%c0_20, %c0_21] : memref<8x1xf32, #tpu.memory_space<vmem>>, vector<8x1xf32>
    tpu.vector_store %arg7[%c0_20, %c0_21], %50 {strides = array<i32>} : memref<8x1xf32, #tpu.memory_space<vmem>>, vector<8x1xf32>,
    %c0_i32_22 = arith.constant 0 : i32
    %52 = arith.cmpi eq, %arg1, %c0_i32_22 : i32
    %53 = arith.extui %52 : i1 to i32
    %c0_i32_23 = arith.constant 0 : i32
    %54 = arith.cmpi ne, %53, %c0_i32_23 : i32
    scf.if %54 {
      %c0_24 = arith.constant 0 : index
      %c0_25 = arith.constant 0 : index
      %55 = vector.load %arg7[%c0_24, %c0_25] : memref<8x1xf32, #tpu.memory_space<vmem>>, vector<8x1xf32>
      %56 = vector.shape_cast %55 : vector<8x1xf32> to vector<1x8x1xf32>
      %cst_26 = arith.constant dense<0.000000e+00> : vector<1xf32>
      %57 = vector.multi_reduction <add>, %56, %cst_26 [1, 2] : vector<1x8x1xf32> to vector<1xf32>
      %58 = vector.shape_cast %57 : vector<1xf32> to vector<1x1x1xf32>
      %59 = vector.extract %58[0, 0, 0] : f32 from vector<1x1x1xf32>
      %cst_27 = arith.constant 0.000000e+00 : f32
      %60 = vector.broadcast %cst_27 : f32 to vector<1x8x128xf32>
      %61 = vector.broadcast %59 : f32 to vector<1x8x128xf32>
      %62 = arith.addf %60, %61 : vector<1x8x128xf32>
      %c0_28 = arith.constant 0 : index
      %c0_29 = arith.constant 0 : index
      %c0_30 = arith.constant 0 : index
      %63 = vector.load %arg6[%c0_28, %c0_29, %c0_30] : memref<1x8x128xf32, #tpu.memory_space<vmem>>, vector<1x8x128xf32>
      tpu.vector_store %arg6[%c0_28, %c0_29, %c0_30], %62 {strides = array<i32>} : memref<1x8x128xf32, #tpu.memory_space<vmem>>, vector<1x8x128xf32>,
    } else {
    }
    return
  }
  func.func @transform_0(%arg0: i32, %arg1: i32) -> (i32, i32) {
    %c1_i32 = arith.constant 1 : i32
    %0 = arith.muli %arg0, %c1_i32 : i32
    %1 = arith.addi %0, %arg1 : i32
    %c1_i32_0 = arith.constant 1 : i32
    %2 = arith.minsi %1, %c1_i32_0 : i32
    %c0_i32 = arith.constant 0 : i32
    %c0_i32_1 = arith.constant 0 : i32
    return %2, %c0_i32 : i32, i32
  }
  func.func @transform_1(%arg0: i32, %arg1: i32) -> (i32, i32) {
    %c0_i32 = arith.constant 0 : i32
    %c0_i32_0 = arith.constant 0 : i32
    %c0_i32_1 = arith.constant 0 : i32
    return %c0_i32, %c0_i32_0 : i32, i32
  }
  func.func @transform_2(%arg0: i32, %arg1: i32) -> (i32, i32) {
    %c1_i32 = arith.constant 1 : i32
    %0 = arith.muli %arg0, %c1_i32 : i32
    %1 = arith.addi %0, %arg1 : i32
    %c1_i32_0 = arith.constant 1 : i32
    %2 = arith.minsi %1, %c1_i32_0 : i32
    %c0_i32 = arith.constant 0 : i32
    %c0_i32_1 = arith.constant 0 : i32
    return %2, %c0_i32 : i32, i32
  }
  func.func @transform_3(%arg0: i32, %arg1: i32) -> (i32, i32) {
    %c0_i32 = arith.constant 0 : i32
    %c0_i32_0 = arith.constant 0 : i32
    %c0_i32_1 = arith.constant 0 : i32
    return %c0_i32, %c0_i32_0 : i32, i32
  }
  func.func @transform_4(%arg0: i32, %arg1: i32) -> (i32, i32, i32) {
    %c0_i32 = arith.constant 0 : i32
    %c0_i32_0 = arith.constant 0 : i32
    %c0_i32_1 = arith.constant 0 : i32
    return %arg0, %c0_i32, %c0_i32_0 : i32, i32, i32
  }
}

</mosaic_0001>

<llo_original>
// kernel: tpu_custom_call.1
$region0: #{tpu_custom_call.1}
  #allocation0 [shape = 'u32[]', space=smem, size = 0x4, offset = 0x4, fixed_abs, tag = 'smem constant byte address 0x4 - core index']
  #allocation1 [shape = 'u32[144,128]{1,0:T(1,128)}', space=vmem, size = 0x12000, scoped, tag = 'internal scratch']
  #allocation2 [shape = 'f32[8,1]{1,0:T(8,128)}', space=vmem, size = 0x1000, scoped, tag = 'scratch operand']
  #allocation3 [shape = 'f32[1,1]{1,0:T(1,128)S(6)}', space=smem, size = 0x200, scoped, tag = 'scoped memory for tpu_custom_call.1']
  %s0 = inlined_call_operand.vmem [shape: f32[13,32], index: 0, kind: input, shape index: {}]
  %s1 = inlined_call_operand.vmem [shape: f32[1,32], index: 1, kind: input, shape index: {}]
  %s2 = inlined_call_operand.vmem [shape: f32[13,1], index: 2, kind: input, shape index: {}]
  %s3 = inlined_call_operand.<no memory space> [shape: f32[1,1], index: 3, kind: input, shape index: {}]
  %s4 = inlined_call_operand.hbm [shape: f32[2,8,128], index: 4, kind: output, shape index: {}]
  %s5 = sld [smem:[#allocation0]]
  $region57: #{tpu_custom_call.1} parent=0
    _
  %s7 = ssub.s32 1, %s5
  %s8 = scalar_select 0, %s7, %s5
  %9 = sst [smem:[#allocation3]] %s3
  $region1: #{tpu_custom_call.1} parent=0
    #allocation4 [shape = 'u8[8192]{0}', space=vmem, size = 0x2000, scoped, tag = 'output window, operand 0']
    #allocation5 [shape = 's32[2]{0}', space=sflag, size = 0x8, scoped, tag = 'scoped memory for tpu_custom_call.1']
    %10 = vsyncpa [#allocation5], 0
    %s11 = scalar_lea.sflag [#allocation5], 1
    %12 = vsyncpa %s11, 0
    loop: start=0, step=1, limit=4
    $region2: #{tpu_custom_call.1} parent=1 // loop_pre_header
      _
    $region3: #{tpu_custom_call.1} parent=1 // loop_header
      %s14 = sphi 0, %s18
      %p15 = scmp.ge.s32.totalorder %s14, 4
      %s21 = sphi 0, %s33
      %s22 = sphi 0, %s29
      %s23 = sphi 0, %s21
      %s24 = sphi 0, %s22
      %s25 = sphi 0, %s23
      %s26 = sphi 0, %s24
      %s42 = sphi 0, %s44
      %s45 = sphi 0, %s42
      %s46 = sphi 0, %s45
      %s62 = sphi 0, %s46
      %s66 = sphi 0, %s66
      %s68 = sphi 0, %s66
      %s69 = sphi 0, %s68
      %s83 = sphi 0, %s69
      %s95 = sphi 0, %s97
      %s98 = sphi 0, %s95
      %s99 = sphi 0, %s98
      %s115 = sphi 0, %s99
      %s119 = sphi 0, %s119
      %s121 = sphi 0, %s119
      %s122 = sphi 0, %s121
      %s136 = sphi 0, %s122
      %s142 = sphi 0, %s144
      %s145 = sphi 0, %s142
      %s146 = sphi 0, %s145
      %s162 = sphi 0, %s146
    $region4: #{tpu_custom_call.1} parent=1 // loop_header_branch
      %17 = sbr.rel (%p15) target = $region8
    $region5: #{tpu_custom_call.1} parent=1 // loop_body
      %s19 = ssub.s32 %s14, 1
      %s20 = ssub.s32 %s14, 2
      %s27 = sadd.s32 1, %s22
      %p28 = scmp.ge.s32.totalorder %s27, 1
      %s29 = scalar_select %p28, 0, %s27
      %s30 = sadd.s32 1, %s21
      %s31 = scalar_select %p28, %s30, %s21
      %p32 = scmp.ge.s32.totalorder %s31, 2
      %s33 = scalar_select %p32, 0, %s31
      %s34 = sadd.s32 %s21, %s22
      %p35 = scmp.lt.s32.totalorder %s34, 1
      %s36 = scalar_select %p35, %s34, 1
      %s37 = sadd.s32 %s33, %s29
      %p38 = scmp.lt.s32.totalorder %s37, 1
      %s39 = scalar_select %p38, %s37, 1
      %s40 = ssub.s32 %s36, %s39
      %p41 = scmp.eq.s32.totalorder %s40, 0
      %s43 = sadd.s32 %s42, 1
      %s44 = scalar_select %p41, %s42, %s43
      %p47 = pneg %p41
      %p48 = scmp.eq.s32.totalorder %s14, 1
      %p49 = por %p47, %p48
      %p50 = scmp.ne.s32.totalorder %s42, %s45
      %p51 = scmp.eq.s32.totalorder %s14, 0
      %p52 = por %p50, %p51
      %p53 = scmp.ne.s32.totalorder %s42, %s45
      %p54 = scmp.eq.s32.totalorder %s19, 1
      %p55 = por %p53, %p54
      %p56 = scmp.ne.s32.totalorder %s45, %s46
      %p57 = scmp.eq.s32.totalorder %s19, 0
      %p58 = por %p56, %p57
      %p59 = scmp.ne.s32.totalorder %s45, %s46
      %p60 = scmp.eq.s32.totalorder %s20, 1
      %p61 = por %p59, %p60
      %p63 = scmp.ne.s32.totalorder %s46, %s62
      %p64 = scmp.eq.s32.totalorder %s20, 0
      %p65 = por %p63, %p64
      %s67 = sadd.s32 %s66, 1
      %p70 = scmp.eq.s32.totalorder %s14, 1
      %p71 = scmp.ne.s32.totalorder %s66, %s68
      %p72 = scmp.eq.s32.totalorder %s14, 0
      %p73 = por %p71, %p72
      %p74 = scmp.ne.s32.totalorder %s66, %s68
      %p75 = scmp.eq.s32.totalorder %s19, 1
      %p76 = por %p74, %p75
      %p77 = scmp.ne.s32.totalorder %s68, %s69
      %p78 = scmp.eq.s32.totalorder %s19, 0
      %p79 = por %p77, %p78
      %p80 = scmp.ne.s32.totalorder %s68, %s69
      %p81 = scmp.eq.s32.totalorder %s20, 1
      %p82 = por %p80, %p81
      %p84 = scmp.ne.s32.totalorder %s69, %s83
      %p85 = scmp.eq.s32.totalorder %s20, 0
      %p86 = por %p84, %p85
      %s87 = sadd.s32 %s21, %s22
      %p88 = scmp.lt.s32.totalorder %s87, 1
      %s89 = scalar_select %p88, %s87, 1
      %s90 = sadd.s32 %s33, %s29
      %p91 = scmp.lt.s32.totalorder %s90, 1
      %s92 = scalar_select %p91, %s90, 1
      %s93 = ssub.s32 %s89, %s92
      %p94 = scmp.eq.s32.totalorder %s93, 0
      %s96 = sadd.s32 %s95, 1
      %s97 = scalar_select %p94, %s95, %s96
      %p100 = pneg %p94
      %p101 = scmp.eq.s32.totalorder %s14, 1
      %p102 = por %p100, %p101
      %p103 = scmp.ne.s32.totalorder %s95, %s98
      %p104 = scmp.eq.s32.totalorder %s14, 0
      %p105 = por %p103, %p104
      %p106 = scmp.ne.s32.totalorder %s95, %s98
      %p107 = scmp.eq.s32.totalorder %s19, 1
      %p108 = por %p106, %p107
      %p109 = scmp.ne.s32.totalorder %s98, %s99
      %p110 = scmp.eq.s32.totalorder %s19, 0
      %p111 = por %p109, %p110
      %p112 = scmp.ne.s32.totalorder %s98, %s99
      %p113 = scmp.eq.s32.totalorder %s20, 1
      %p114 = por %p112, %p113
      %p116 = scmp.ne.s32.totalorder %s99, %s115
      %p117 = scmp.eq.s32.totalorder %s20, 0
      %p118 = por %p116, %p117
      %s120 = sadd.s32 %s119, 1
      %p123 = scmp.eq.s32.totalorder %s14, 1
      %p124 = scmp.ne.s32.totalorder %s119, %s121
      %p125 = scmp.eq.s32.totalorder %s14, 0
      %p126 = por %p124, %p125
      %p127 = scmp.ne.s32.totalorder %s119, %s121
      %p128 = scmp.eq.s32.totalorder %s19, 1
      %p129 = por %p127, %p128
      %p130 = scmp.ne.s32.totalorder %s121, %s122
      %p131 = scmp.eq.s32.totalorder %s19, 0
      %p132 = por %p130, %p131
      %p133 = scmp.ne.s32.totalorder %s121, %s122
      %p134 = scmp.eq.s32.totalorder %s20, 1
      %p135 = por %p133, %p134
      %p137 = scmp.ne.s32.totalorder %s122, %s136
      %p138 = scmp.eq.s32.totalorder %s20, 0
      %p139 = por %p137, %p138
      %s140 = ssub.s32 %s21, %s33
      %p141 = scmp.eq.s32.totalorder %s140, 0
      %s143 = sadd.s32 %s142, 1
      %s144 = scalar_select %p141, %s142, %s143
      %p147 = pneg %p141
      %p148 = scmp.eq.s32.totalorder %s14, 1
      %p149 = por %p147, %p148
      %p150 = scmp.ne.s32.totalorder %s142, %s145
      %p151 = scmp.eq.s32.totalorder %s14, 0
      %p152 = por %p150, %p151
      %p153 = scmp.ne.s32.totalorder %s142, %s145
      %p154 = scmp.eq.s32.totalorder %s19, 1
      %p155 = por %p153, %p154
      %p156 = scmp.ne.s32.totalorder %s145, %s146
      %p157 = scmp.eq.s32.totalorder %s19, 0
      %p158 = por %p156, %p157
      %p159 = scmp.ne.s32.totalorder %s145, %s146
      %p160 = scmp.eq.s32.totalorder %s20, 1
      %p161 = por %p159, %p160
      %p163 = scmp.ne.s32.totalorder %s146, %s162
      %p164 = scmp.eq.s32.totalorder %s20, 0
      %p165 = por %p163, %p164
      %p166 = scmp.le.s32.totalorder 1, %s14
      %p167 = scmp.lt.s32.totalorder %s14, 3
      %p168 = pnand %p166, %p167
      %p169 = pneg %p168
      // Predicated region
      $region9: #{tpu_custom_call.1} parent=5 // pred_check
        _
      $region10: #{tpu_custom_call.1} parent=5 // pred_check_branch
        %171 = sbr.rel (%p168) target = $region12
      $region11: #{tpu_custom_call.1} parent=5 // pred_region
        %s172 = ssub.s32 %s14, 1
        // Predicated region
        $region13: #{tpu_custom_call.1} parent=11 // pred_check
          %p173 = pneg %p79
        $region14: #{tpu_custom_call.1} parent=11 // pred_check_branch
          %175 = sbr.rel (%p173) target = $region16
        $region15: #{tpu_custom_call.1} parent=11 // pred_region
          _
        $region16: #{tpu_custom_call.1} parent=11 // pred_fallthru
          _
        // Predicated region
        $region17: #{tpu_custom_call.1} parent=11 // pred_check
          %p176 = pneg %p132
        $region18: #{tpu_custom_call.1} parent=11 // pred_check_branch
          %178 = sbr.rel (%p176) target = $region20
        $region19: #{tpu_custom_call.1} parent=11 // pred_region
          _
        $region20: #{tpu_custom_call.1} parent=11 // pred_fallthru
          _
      $region12: #{tpu_custom_call.1} parent=5 // pred_fallthru
        _
      %p179 = scmp.lt.s32.totalorder %s14, 2
      // Predicated region
      $region21: #{tpu_custom_call.1} parent=5 // pred_check
        %p180 = pneg %p179
      $region22: #{tpu_custom_call.1} parent=5 // pred_check_branch
        %182 = sbr.rel (%p180) target = $region24
      $region23: #{tpu_custom_call.1} parent=5 // pred_region
        // Predicated region
        $region25: #{tpu_custom_call.1} parent=23 // pred_check
          %p183 = pneg %p52
        $region26: #{tpu_custom_call.1} parent=23 // pred_check_branch
          %185 = sbr.rel (%p183) target = $region28
        $region27: #{tpu_custom_call.1} parent=23 // pred_region
          %s186 = sadd.s32 %s21, %s22
          %p187 = scmp.lt.s32.totalorder %s186, 1
          %s188 = scalar_select %p187, %s186, 1
          %p189 = scmp.lt.s32.totalorder %s188, 1
          %s190 = scalar_select %p189, %s188, 1
          %s191 = smul.addr %s190, 8
          %s192 = scalar_lea.vmem %s0, %s191
          %s193 = sadd.s32 %s21, %s22
          %p194 = scmp.lt.s32.totalorder %s193, 1
          %s195 = scalar_select %p194, %s193, 1
        $region28: #{tpu_custom_call.1} parent=23 // pred_fallthru
          _
        // Predicated region
        $region29: #{tpu_custom_call.1} parent=23 // pred_check
          %p196 = pneg %p105
        $region30: #{tpu_custom_call.1} parent=23 // pred_check_branch
          %198 = sbr.rel (%p196) target = $region32
        $region31: #{tpu_custom_call.1} parent=23 // pred_region
          %s199 = sadd.s32 %s21, %s22
          %p200 = scmp.lt.s32.totalorder %s199, 1
          %s201 = scalar_select %p200, %s199, 1
          %p202 = scmp.lt.s32.totalorder %s201, 1
          %s203 = scalar_select %p202, %s201, 1
          %s204 = smul.addr %s203, 8
          %s205 = scalar_lea.vmem %s2, %s204
          %s206 = sadd.s32 %s21, %s22
          %p207 = scmp.lt.s32.totalorder %s206, 1
          %s208 = scalar_select %p207, %s206, 1
        $region32: #{tpu_custom_call.1} parent=23 // pred_fallthru
          _
      $region24: #{tpu_custom_call.1} parent=5 // pred_fallthru
        _
      %p209 = scmp.le.s32.totalorder 1, %s14
      %p210 = scmp.lt.s32.totalorder %s14, 3
      %p211 = pnand %p209, %p210
      %p212 = pneg %p211
      // Predicated region
      $region33: #{tpu_custom_call.1} parent=5 // pred_check
        _
      $region34: #{tpu_custom_call.1} parent=5 // pred_check_branch
        %214 = sbr.rel (%p211) target = $region36
      $region35: #{tpu_custom_call.1} parent=5 // pred_region
        %s215 = ssub.s32 %s14, 1
        %s216 = sadd.s32 %s23, %s24
        %p217 = scmp.lt.s32.totalorder %s216, 1
        %s218 = scalar_select %p217, %s216, 1
        %p219 = scmp.lt.s32.totalorder %s218, 1
        %s220 = scalar_select %p219, %s218, 1
        %s221 = smul.addr %s220, 8
        %s222 = scalar_lea.vmem %s0, %s221
        %p223 = pneg %p58
        %p224 = pneg %p55
        %p225 = pneg %p79
        %p226 = pneg %p76
        %s227 = sadd.s32 %s23, %s24
        %p228 = scmp.lt.s32.totalorder %s227, 1
        %s229 = scalar_select %p228, %s227, 1
        %p230 = scmp.lt.s32.totalorder %s229, 1
        %s231 = scalar_select %p230, %s229, 1
        %s232 = smul.addr %s231, 8
        %s233 = scalar_lea.vmem %s2, %s232
        %p234 = pneg %p111
        %p235 = pneg %p108
        %p236 = pneg %p132
        %p237 = pneg %p129
        %p238 = pneg %p158
        %p239 = pneg %p155
        %s240 = sand.u32 %s145, 1
        %s241 = scalar_lea.sflag [#allocation5], %s240
        %s242 = sand.u32 %s145, 1
        %s243 = smul.addr %s242, 8
        %s244 = scalar_lea.vmem [#allocation4], %s243
        %s245 = sadd.s32 %s23, %s24
        %p246 = scmp.lt.s32.totalorder %s245, 1
        %s247 = scalar_select %p246, %s245, 1
        %p248 = scmp.lt.s32.totalorder %s247, 1
        %s249 = scalar_select %p248, %s247, 1
        %s250 = smul.addr %s249, 8
        %s251 = scalar_lea.vmem %s0, %s250
        %s252 = sadd.s32 %s23, %s24
        %p253 = scmp.lt.s32.totalorder %s252, 1
        %s254 = scalar_select %p253, %s252, 1
        %s255 = sadd.s32 %s23, %s24
        %p256 = scmp.lt.s32.totalorder %s255, 1
        %s257 = scalar_select %p256, %s255, 1
        %p258 = scmp.lt.s32.totalorder %s257, 1
        %s259 = scalar_select %p258, %s257, 1
        %s260 = smul.addr %s259, 8
        %s261 = scalar_lea.vmem %s2, %s260
        %s262 = sadd.s32 %s23, %s24
        %p263 = scmp.lt.s32.totalorder %s262, 1
        %s264 = scalar_select %p263, %s262, 1
        %p265 = scmp.eq.s32.totalorder %s24, 0
        // Predicated region
        $region37: #{tpu_custom_call.1} parent=35 // pred_check
          %p266 = pneg %p265
        $region38: #{tpu_custom_call.1} parent=35 // pred_check_branch
          %268 = sbr.rel (%p266) target = $region40
        $region39: #{tpu_custom_call.1} parent=35 // pred_region
          %vm269 = vcmask 7168
          %270 = vst.msk [vmem:[#allocation2] sm:$0xff] %vm269, 0.0
        $region40: #{tpu_custom_call.1} parent=35 // pred_fallthru
          _
        %v271 = vld [vmem:[%s251] sm:$0xff]
        %v272 = vld [vmem:[%s1] sm:$0x1]
        %v273 = vld [vmem:[%s261] sm:$0xff]
        %s274 = sld [smem:[#allocation3]]
        %v276 = vlaneseq
        %v277 = vshrl.u32 %v276, 7
        %v278 = vsub.s32 0, %v277
        %v279 = vrot.slane %v272, %v278
        %v281 = vmul.f32 %v271, %v279
        %vm282 = vcmask 261120
        %v283 = vsel %vm282, %v281, 0.0
        %284 = vadd.xlane.f32.xlu0 %v283
        %v285 = vpop.xlane.xlu0 %284
        %v286 = vstv %s274
        %v287 = vadd.f32 %v285, %v286
        %v288 = vsub.f32 0.0, %v287
        %v289 = vmax.f32 %v288, 0.0
        %v290 = vand.u32 2147483647, %v287
        %v291 = vsub.f32 0.0, %v290
        %v292 = vmul.f32 %v291, 1.442695
        %v293 = vpow.pop %v292
        %v294 = vadd.f32 %v293, 1.0
        %v295 = vlog2.pop %v294
        %v296 = vmul.f32 %v295, 0.6931472
        %v297 = vmul.f32 -0.5, %v293
        %v298 = vadd.f32 %v297, 1.0
        %v299 = vmul.f32 %v298, %v293
        %v300 = vand.u32 2147483647, %v293
        %vm301 = vcmp.lt.f32.partialorder %v300, 0.0004427343
        %v302 = vsel %vm301, %v299, %v296
        %v303 = vadd.f32 %v289, %v302
        %v304 = vsub.f32 0.0, %v303
        %v305 = vmax.f32 %v304, -100.0
        %v306 = vsub.f32 %v288, %v303
        %v307 = vmax.f32 %v306, -100.0
        %v308 = vmul.f32 %v273, %v305
        %v309 = vsub.f32 1.0, %v273
        %v310 = vmul.f32 %v309, %v307
        %v311 = vadd.f32 %v308, %v310
        %v312 = vsub.f32 0.0, %v311
        %s313 = sadd.s32 %s23, %s24
        %s314 = smul.u32 %s313, 8
        %v315 = vlaneseq
        %v316 = vshrl.u32 %v315, 7
        %v317 = vstv %s314
        %v318 = vadd.s32 %v317, %v316
        %vm319 = vcmp.lt.s32.totalorder %v318, 13
        %v320 = vsel %vm319, %v312, 0.0
        %v321 = vld [vmem:[#allocation2] sm:$0xff]
        %v322 = vadd.f32 %v321, %v320
        %vm323 = vcmask 7168
        %324 = vst.msk [vmem:[#allocation2] sm:$0xff] %vm323, %v322
        // Predicated region
        $region41: #{tpu_custom_call.1} parent=35 // pred_check
          %p325 = pneg %p265
        $region42: #{tpu_custom_call.1} parent=35 // pred_check_branch
          %327 = sbr.rel (%p325) target = $region44
        $region43: #{tpu_custom_call.1} parent=35 // pred_region
          %v328 = vld [vmem:[#allocation2] sm:$0xff]
          %v329 = vsel %vm323, %v328, 0.0
          %330 = vadd.xlane.f32.xlu0 %v329
          %v331 = vpop.xlane.xlu0 %330
          %v332 = vrot.slane %v331, 4
          %v333 = vadd.f32 %v331, %v332
          %v334 = vrot.slane %v333, 2
          %v335 = vadd.f32 %v333, %v334
          %v336 = vrot.slane %v335, 1
          %v337 = vadd.f32 %v335, %v336
          %s338 = vtos %v337
          %v339 = vstv %s338
          %v340 = vadd.f32 %v339, 0.0
          %341 = vst [vmem:[%s244] sm:$0xff] %v340
        $region44: #{tpu_custom_call.1} parent=35 // pred_fallthru
          _
        %s342 = sand.u32 %s145, 1
        %s343 = scalar_lea.sflag [#allocation5], %s342
        %s344 = sand.u32 %s145, 1
        %s345 = smul.addr %s344, 8
        %s346 = scalar_lea.vmem [#allocation4], %s345
        // Predicated region
        $region45: #{tpu_custom_call.1} parent=35 // pred_check
          %p347 = pneg %p155
        $region46: #{tpu_custom_call.1} parent=35 // pred_check_branch
          %349 = sbr.rel (%p347) target = $region48
        $region47: #{tpu_custom_call.1} parent=35 // pred_region
          %s351 = ssub.s32 128, 128
          %352 = vsyncadd %s343, %s351
          %s353 = smul.addr %s23, 128
          %s354 = scalar_lea.hbm %s4, %s353
          %s356 = sshll.u32 %s346, 4
          %s357 = int_to_ptr.vmem [resolvable:$true] %s356
          %359 = dma.vmem_to_hbm [thread:$0]  %s357, 128, %s354, %s343
        $region48: #{tpu_custom_call.1} parent=35 // pred_fallthru
          _
      $region36: #{tpu_custom_call.1} parent=5 // pred_fallthru
        _
      %p360 = scmp.le.s32.totalorder 2, %s14
      // Predicated region
      $region49: #{tpu_custom_call.1} parent=5 // pred_check
        %p361 = pneg %p360
      $region50: #{tpu_custom_call.1} parent=5 // pred_check_branch
        %363 = sbr.rel (%p361) target = $region52
      $region51: #{tpu_custom_call.1} parent=5 // pred_region
        %s364 = ssub.s32 %s14, 2
        // Predicated region
        $region53: #{tpu_custom_call.1} parent=51 // pred_check
          %p365 = pneg %p161
        $region54: #{tpu_custom_call.1} parent=51 // pred_check_branch
          %367 = sbr.rel (%p365) target = $region56
        $region55: #{tpu_custom_call.1} parent=51 // pred_region
          %s368 = sand.u32 %s146, 1
          %s369 = scalar_lea.sflag [#allocation5], %s368
          %s370 = sand.u32 %s146, 1
          %s371 = smul.addr %s370, 8
          %s372 = scalar_lea.vmem [#allocation4], %s371
          %373 = dma.done %s369, 128
        $region56: #{tpu_custom_call.1} parent=51 // pred_fallthru
          _
      $region52: #{tpu_custom_call.1} parent=5 // pred_fallthru
        _
    $region6: #{tpu_custom_call.1} parent=1 // loop_footer
      %s18 = sadd.s32 1, %s14
    $region7: #{tpu_custom_call.1} parent=1 // loop_footer_branch
      %13 = sbr.rel target = $region3
    $region8: #{tpu_custom_call.1} parent=1 // loop_exit
      _
    %374 = vsyncpa [#allocation5], 1
    %s375 = scalar_lea.sflag [#allocation5], 1
    %376 = vsyncpa %s375, 1

</llo_original>
